<compile_context>
chip_gen: v6e
topology: v6e:2x2x1
jax: 0.10.0
libtpu: 0.0.40
codegen_flags: <defaults>
</compile_context>

<pallas_src>
import functools
import math

import jax
import jax.numpy as jnp
import numpy as np
from jax.experimental import pallas as pl
from jax.experimental.pallas import tpu as pltpu


def _graph_conv_kernel(K, contract_dtype, lap_ref, x_ref, w_ref, b_ref, o_ref):
    """One grid step: Chebyshev recursion + per-order contraction for TB signals.

    lap_ref : (V, V)              dense Laplacian (constant index_map, resident)
    x_ref   : (V, TC)             TC = TB*Fin slab columns (batch-major)
    w_ref   : (K, TC, TB*Fout)    per-order batch-block-diagonal weight
    b_ref   : (1, TB*Fout)        bias broadcast over the tile's columns
    o_ref   : (V, TB*Fout)        lane-dense output slab tile
    """
    lap = lap_ref[...]
    t_prev = x_ref[...]                                       # T0 (f32)

    # Per-order accumulate: w_ref[k] is a static first-axis slice (free view).
    acc = jnp.dot(t_prev.astype(contract_dtype), w_ref[0],
                  preferred_element_type=jnp.float32)
    if K > 1:
        t_cur = jnp.dot(lap, t_prev, preferred_element_type=jnp.float32)  # T1
        acc += jnp.dot(t_cur.astype(contract_dtype), w_ref[1],
                       preferred_element_type=jnp.float32)
        for k in range(2, K):                                  # static -> unrolled
            t_next = (2.0 * jnp.dot(lap, t_cur, preferred_element_type=jnp.float32)
                      - t_prev)
            acc += jnp.dot(t_next.astype(contract_dtype), w_ref[k],
                           preferred_element_type=jnp.float32)
            t_prev, t_cur = t_cur, t_next

    o_ref[...] = (acc + b_ref[...]).astype(o_ref.dtype)


@functools.lru_cache(maxsize=1)
def _single_buffer_supported():
    """Trace/compile-time feature probe for pl.Buffered(1) BlockSpecs.

    Runs on a tiny dummy kernel, never on the real one, so a genuine runtime
    failure of the real kernel (e.g. VMEM OOM) is never silently retried.
    """
    if not hasattr(pl, "Buffered"):
        return False

    def probe_kernel(c_ref, x_ref, o_ref):
        o_ref[...] = x_ref[...] + c_ref[...]

    try:
        fn = pl.pallas_call(
            probe_kernel,
            out_shape=jax.ShapeDtypeStruct((8, 128), jnp.float32),
            grid_spec=pltpu.PrefetchScalarGridSpec(
                num_scalar_prefetch=0,
                grid=(1,),
                in_specs=[
                    pl.BlockSpec((8, 128), lambda i: (0, 0),
                                 pipeline_mode=pl.Buffered(1)),
                    pl.BlockSpec((8, 128), lambda i: (0, 0)),
                ],
                out_specs=pl.BlockSpec((8, 128), lambda i: (0, 0)),
            ),
        )
        z = jax.ShapeDtypeStruct((8, 128), jnp.float32)
        jax.jit(fn).lower(z, z).compile()
        return True
    except Exception:  # probe-only: any rejection means "feature unsupported"
        return False


def _pick_batch_tile(B, V, Fin, Fout, K, w_itemsize):
    """Pick TB = number of signals handled per grid step.

    Block rule: minor tile dims must be 128-lane aligned or span the full
    array axis.  Within that, bound TB by the block-diagonal redundancy
    (TB*Fout <~ V) and the quadratic-in-TB weight-tile size (<= 4 MiB), and
    prefer >= 4 grid steps (2 per v7x TensorCore keeps the x-tile DMA hidden)
    as long as per-step tiles stay reasonably wide.
    """
    cands = [tb for tb in range(1, B + 1)
             if B % tb == 0 and (tb * Fin) % 128 == 0 and (tb * Fout) % 128 == 0]
    if not cands:
        return B  # tiny shapes: one full-width step (full-extent blocks are legal)

    def fits(tb):
        w_bytes = K * (tb * Fin) * (tb * Fout) * w_itemsize
        return tb * Fout <= max(V, 128) and w_bytes <= 4 * 1024 * 1024

    pool = [tb for tb in cands if fits(tb)] or [min(cands)]
    for rule in (lambda tb: B // tb >= 4 and tb * Fin >= 256,
                 lambda tb: B // tb >= 2):
        pref = [tb for tb in pool if rule(tb)]
        if pref:
            return max(pref)
    return max(pool)


def graph_conv_pallas(laplacian, x, weight, bias, *, batch_tile=None,
                      contract_dtype=jnp.bfloat16):
    """Pallas implementation of GraphConv.forward (dense Laplacian).

    laplacian : (V, V) float32
    x         : (B, V, Fin)     n_signals x n_vertices x n_features
    weight    : (Fin, K, Fout)  module parameter layout
    bias      : (Fout,) or None
    contract_dtype : dtype for the (Tk, W) contraction operands (accumulation
                     is always f32).  bf16 is the fast path; f32 is exact.
    """
    B, V, Fin = x.shape
    Fin_w, K, Fout = weight.shape
    assert Fin_w == Fin
    if bias is None:
        bias = jnp.zeros((Fout,), dtype=jnp.float32)

    w_itemsize = jnp.dtype(contract_dtype).itemsize
    TB = batch_tile if batch_tile is not None else _pick_batch_tile(
        B, V, Fin, Fout, K, w_itemsize)
    assert B % TB == 0
    n_tiles = B // TB
    TC = TB * Fin
    TO = TB * Fout

    # ---- glue: layout plumbing only (no compute hoisted out of the kernel) ----
    # x -> (V, B*Fin) slab with batch-major columns: col = b*Fin + fin.
    x_slab = jnp.transpose(x, (1, 0, 2)).reshape(V, B * Fin)
    # weight (Fin, K, Fout) -> per-order batch-block-diagonal (K, TB*Fin, TB*Fout)
    # so the (fin) contraction for TB signals at order k is one lane-dense matmul.
    w_kfo = jnp.transpose(weight, (1, 0, 2))                       # (K, Fin, Fout)
    eye_tb = jnp.eye(TB, dtype=weight.dtype)
    w_big = jnp.einsum("kfo,bc->kbfco", w_kfo, eye_tb)
    w_big = w_big.reshape(K, TC, TO).astype(contract_dtype)
    b_big = jnp.tile(bias.reshape(1, Fout).astype(jnp.float32), (1, TB))  # (1, TO)
    # Recursion Laplacian stays f32 (bf16 L is a further VMEM lever but can
    # amplify error through the Chebyshev recursion).
    lap = laplacian.astype(jnp.float32)

    kernel = functools.partial(_graph_conv_kernel, K, contract_dtype)
    out_itemsize = jnp.dtype(x.dtype).itemsize
    out_shape = jax.ShapeDtypeStruct((V, B * Fout), x.dtype)

    # VMEM budget from the actual resident set (+headroom), clamped so it
    # stays below v7x's 64 MiB physical VMEM.
    f32b = 4
    w_bytes = K * TC * TO * w_itemsize
    resident = V * V * f32b + w_bytes + TO * f32b            # L + W + bias (1x)
    pipelined = 2 * V * TC * f32b + 2 * V * TO * out_itemsize  # x/out double-buffered
    live = 3 * V * TC * f32b + 2 * V * TO * f32b             # T slabs + acc
    vmem_limit = int(1.5 * (resident + pipelined + live)) + (1 << 20)
    vmem_limit = min(max(vmem_limit, 32 << 20), 48 << 20)

    cost = pl.CostEstimate(
        flops=2 * (K - 1) * V * V * B * Fin + 2 * K * V * B * Fin * TB * Fout,
        transcendentals=0,
        bytes_accessed=(x_slab.size * f32b + V * V * f32b + w_bytes
                        + b_big.size * f32b + V * B * Fout * out_itemsize),
    )

    single_buffer = _single_buffer_supported()

    def resident_spec(shape):
        # Constant-index blocks (L, W, bias): single-buffer when supported so
        # they do not pay 2x VMEM under the default double-buffered pipeline.
        idx = lambda j, n=len(shape): (0,) * n
        if single_buffer:
            return pl.BlockSpec(shape, idx, pipeline_mode=pl.Buffered(1))
        return pl.BlockSpec(shape, idx)

    grid_spec = pltpu.PrefetchScalarGridSpec(
        num_scalar_prefetch=0,
        grid=(n_tiles,),
        in_specs=[
            resident_spec((V, V)),                        # laplacian
            pl.BlockSpec((V, TC), lambda j: (0, j)),      # x slab column tile
            resident_spec((K, TC, TO)),                   # per-order block-diag W
            resident_spec((1, TO)),                       # bias
        ],
        out_specs=pl.BlockSpec((V, TO), lambda j: (0, j)),
    )

    out_slab = pl.pallas_call(
        kernel,
        out_shape=out_shape,
        grid_spec=grid_spec,
        compiler_params=pltpu.CompilerParams(
            dimension_semantics=("parallel",),
            vmem_limit_bytes=vmem_limit),
        cost_estimate=cost,
    )(lap, x_slab, w_big, b_big)

    # (V, B*Fout) -> (B, V, Fout): layout plumbing.
    # TODO(synk): if the surrounding model keeps activations in (V, B*F)
    # layout across layers, this transpose and the x_slab one can be dropped.
    return jnp.transpose(out_slab.reshape(V, B, Fout), (1, 0, 2))


def graph_conv_ref(laplacian, x, weight, bias):
    """Pure-JAX port of the PyTorch graph_conv (for correctness checking)."""
    B, V, Fin = x.shape
    Fin, K, Fout = weight.shape
    x0 = jnp.transpose(x, (1, 2, 0)).reshape(V, Fin * B)
    xs = [x0]
    if K > 1:
        x1 = laplacian @ x0
        xs.append(x1)
        for _ in range(2, K):
            x2 = 2.0 * (laplacian @ x1) - x0
            xs.append(x2)
            x0, x1 = x1, x2
    xk = jnp.stack(xs, 0).reshape(K, V, Fin, B)
    xk = jnp.transpose(xk, (3, 1, 2, 0)).reshape(B * V, Fin * K)
    out = xk @ weight.reshape(Fin * K, Fout)
    return out.reshape(B, V, Fout) + bias


def _run_case(key, B, V, Fin, Fout, K, contract_dtype, rtol, atol):
    k_lap, k_x, k_w, k_b = jax.random.split(key, 4)

    # Dense "Laplacian": L = D - A with random symmetric A, rescaled to a
    # roughly [-1, 1] spectrum (standard Chebyshev setup).
    a = jax.random.uniform(k_lap, (V, V), dtype=jnp.float32)
    a = 0.5 * (a + a.T)
    lap = jnp.diag(jnp.sum(a, axis=1)) - a
    lmax = jnp.max(jnp.sum(jnp.abs(lap), axis=1))
    lap = 2.0 * lap / lmax - jnp.eye(V, dtype=jnp.float32)

    # Inputs: n_signals x n_vertices x n_features.
    x = jax.random.normal(k_x, (B, V, Fin), dtype=jnp.float32)

    # Parameters, initialized like GraphConv.reset_parameters (nonzero bias so
    # the bias path is actually exercised).
    std = 1.0 / math.sqrt(Fin * (K + 0.5) / 2.0)
    weight = std * jax.random.normal(k_w, (Fin, K, Fout), dtype=jnp.float32)
    bias = 0.1 * jax.random.normal(k_b, (Fout,), dtype=jnp.float32)

    out = jax.block_until_ready(
        graph_conv_pallas(lap, x, weight, bias, contract_dtype=contract_dtype))
    ref = graph_conv_ref(lap, x, weight, bias)
    np.testing.assert_allclose(np.asarray(out), np.asarray(ref),
                               rtol=rtol, atol=atol)


if __name__ == "__main__":
    key = jax.random.PRNGKey(0)
    k1, k2, k3 = jax.random.split(key, 3)

    # Tiny canonical config (single full-width tile, exact f32 contraction).
    _run_case(k1, B=2, V=16, Fin=4, Fout=8, K=3,
              contract_dtype=jnp.float32, rtol=1e-4, atol=1e-4)

    # Multi-tile path: TB=16 -> 128-lane tiles, 4 "parallel" grid steps
    # (>= 2 per v7x TensorCore).  Exact f32 contraction, tight tolerance.
    _run_case(k2, B=64, V=64, Fin=8, Fout=8, K=4,
              contract_dtype=jnp.float32, rtol=1e-4, atol=1e-4)

    # Same shape on the bf16 contraction fast path (f32 accumulation);
    # tolerance loosened for the bf16 operand rounding only.
    _run_case(k3, B=64, V=64, Fin=8, Fout=8, K=4,
              contract_dtype=jnp.bfloat16, rtol=3e-2, atol=3e-2)

    print("KERNEL_OK")
</pallas_src>

<mosaic_0001>
module attributes {stable_mosaic.version = 11 : i64} {
  func.func @_graph_conv_kernel(%arg0: i32, %arg1: memref<16x16xf32, #tpu.memory_space<vmem>>, %arg2: memref<16x8xf32, #tpu.memory_space<vmem>>, %arg3: memref<3x8x16xf32, #tpu.memory_space<vmem>>, %arg4: memref<1x16xf32, #tpu.memory_space<vmem>>, %arg5: memref<16x16xf32, #tpu.memory_space<vmem>>) attributes {dimension_semantics = [#tpu.dimension_semantics<parallel>], iteration_bounds = array<i64: 1>, scalar_prefetch = 0 : i64, scratch_operands = 0 : i64, tpu.core_type = #tpu.core_type<tc>, window_params = [{pipeline_mode = #tpu.pipeline_mode<synchronous>, transform_indices = @transform_0, window_bounds = array<i64: 16, 16>}, {transform_indices = @transform_1, window_bounds = array<i64: 16, 8>}, {pipeline_mode = #tpu.pipeline_mode<synchronous>, transform_indices = @transform_2, window_bounds = array<i64: 3, 8, 16>}, {pipeline_mode = #tpu.pipeline_mode<synchronous>, transform_indices = @transform_3, window_bounds = array<i64: 1, 16>}, {transform_indices = @transform_4, window_bounds = array<i64: 16, 16>}]} {
    %c0 = arith.constant 0 : index
    %c0_0 = arith.constant 0 : index
    %0 = vector.load %arg1[%c0, %c0_0] : memref<16x16xf32, #tpu.memory_space<vmem>>, vector<16x16xf32>
    %c0_1 = arith.constant 0 : index
    %c0_2 = arith.constant 0 : index
    %1 = vector.load %arg2[%c0_1, %c0_2] : memref<16x8xf32, #tpu.memory_space<vmem>>, vector<16x8xf32>
    %c0_3 = arith.constant 0 : index
    %c0_4 = arith.constant 0 : index
    %c0_5 = arith.constant 0 : index
    %2 = vector.load %arg3[%c0_3, %c0_4, %c0_5] : memref<3x8x16xf32, #tpu.memory_space<vmem>>, vector<1x8x16xf32>
    %3 = vector.shape_cast %2 : vector<1x8x16xf32> to vector<8x16xf32>
    %cst = arith.constant dense<0.000000e+00> : vector<16x16xf32>
    %4 = tpu.matmul %1, %3, %cst {dimension_numbers = #tpu.dot_dimension_numbers<[1], [0], [0], [1], [0, 0, 1, 1], [], []>} : vector<16x8xf32>, vector<8x16xf32>, vector<16x16xf32> -> vector<16x16xf32>
    %cst_6 = arith.constant dense<0.000000e+00> : vector<16x8xf32>
    %5 = tpu.matmul %0, %1, %cst_6 {dimension_numbers = #tpu.dot_dimension_numbers<[1], [0], [0], [1], [0, 0, 1, 1], [], []>} : vector<16x16xf32>, vector<16x8xf32>, vector<16x8xf32> -> vector<16x8xf32>
    %c1 = arith.constant 1 : index
    %c0_7 = arith.constant 0 : index
    %c0_8 = arith.constant 0 : index
    %6 = vector.load %arg3[%c1, %c0_7, %c0_8] : memref<3x8x16xf32, #tpu.memory_space<vmem>>, vector<1x8x16xf32>
    %7 = vector.shape_cast %6 : vector<1x8x16xf32> to vector<8x16xf32>
    %cst_9 = arith.constant dense<0.000000e+00> : vector<16x16xf32>
    %8 = tpu.matmul %5, %7, %cst_9 {dimension_numbers = #tpu.dot_dimension_numbers<[1], [0], [0], [1], [0, 0, 1, 1], [], []>} : vector<16x8xf32>, vector<8x16xf32>, vector<16x16xf32> -> vector<16x16xf32>
    %9 = arith.addf %4, %8 : vector<16x16xf32>
    %cst_10 = arith.constant dense<0.000000e+00> : vector<16x8xf32>
    %10 = tpu.matmul %0, %5, %cst_10 {dimension_numbers = #tpu.dot_dimension_numbers<[1], [0], [0], [1], [0, 0, 1, 1], [], []>} : vector<16x16xf32>, vector<16x8xf32>, vector<16x8xf32> -> vector<16x8xf32>
    %cst_11 = arith.constant 2.000000e+00 : f32
    %11 = vector.broadcast %cst_11 : f32 to vector<16x8xf32>
    %12 = arith.mulf %11, %10 : vector<16x8xf32>
    %13 = arith.subf %12, %1 : vector<16x8xf32>
    %c2 = arith.constant 2 : index
    %c0_12 = arith.constant 0 : index
    %c0_13 = arith.constant 0 : index
    %14 = vector.load %arg3[%c2, %c0_12, %c0_13] : memref<3x8x16xf32, #tpu.memory_space<vmem>>, vector<1x8x16xf32>
    %15 = vector.shape_cast %14 : vector<1x8x16xf32> to vector<8x16xf32>
    %cst_14 = arith.constant dense<0.000000e+00> : vector<16x16xf32>
    %16 = tpu.matmul %13, %15, %cst_14 {dimension_numbers = #tpu.dot_dimension_numbers<[1], [0], [0], [1], [0, 0, 1, 1], [], []>} : vector<16x8xf32>, vector<8x16xf32>, vector<16x16xf32> -> vector<16x16xf32>
    %17 = arith.addf %9, %16 : vector<16x16xf32>
    %c0_15 = arith.constant 0 : index
    %c0_16 = arith.constant 0 : index
    %18 = vector.load %arg4[%c0_15, %c0_16] : memref<1x16xf32, #tpu.memory_space<vmem>>, vector<1x16xf32>
    %19 = vector.broadcast %18 : vector<1x16xf32> to vector<16x16xf32>
    %20 = arith.addf %17, %19 : vector<16x16xf32>
    %c0_17 = arith.constant 0 : index
    %c0_18 = arith.constant 0 : index
    %21 = vector.load %arg5[%c0_17, %c0_18] : memref<16x16xf32, #tpu.memory_space<vmem>>, vector<16x16xf32>
    tpu.vector_store %arg5[%c0_17, %c0_18], %20 {strides = array<i32>} : memref<16x16xf32, #tpu.memory_space<vmem>>, vector<16x16xf32>,
    return
  }
  func.func @transform_0(%arg0: i32) -> (i32, i32) {
    %c0_i32 = arith.constant 0 : i32
    %c0_i32_0 = arith.constant 0 : i32
    %c0_i32_1 = arith.constant 0 : i32
    return %c0_i32, %c0_i32_0 : i32, i32
  }
  func.func @transform_1(%arg0: i32) -> (i32, i32) {
    %c0_i32 = arith.constant 0 : i32
    %c0_i32_0 = arith.constant 0 : i32
    return %c0_i32, %arg0 : i32, i32
  }
  func.func @transform_2(%arg0: i32) -> (i32, i32, i32) {
    %c0_i32 = arith.constant 0 : i32
    %c0_i32_0 = arith.constant 0 : i32
    %c0_i32_1 = arith.constant 0 : i32
    %c0_i32_2 = arith.constant 0 : i32
    return %c0_i32, %c0_i32_0, %c0_i32_1 : i32, i32, i32
  }
  func.func @transform_3(%arg0: i32) -> (i32, i32) {
    %c0_i32 = arith.constant 0 : i32
    %c0_i32_0 = arith.constant 0 : i32
    %c0_i32_1 = arith.constant 0 : i32
    return %c0_i32, %c0_i32_0 : i32, i32
  }
  func.func @transform_4(%arg0: i32) -> (i32, i32) {
    %c0_i32 = arith.constant 0 : i32
    %c0_i32_0 = arith.constant 0 : i32
    return %c0_i32, %arg0 : i32, i32
  }
}

</mosaic_0001>

<llo_original>
// kernel: tpu_custom_call.1
$region0: #{tpu_custom_call.1}
  #allocation0 [shape = 'u32[]', space=smem, size = 0x4, offset = 0x4, fixed_abs, tag = 'smem constant byte address 0x4 - core index']
  #allocation1 [shape = 'u32[144,128]{1,0:T(1,128)}', space=vmem, size = 0x12000, scoped, tag = 'internal scratch']
  %s0 = inlined_call_operand.hbm [shape: f32[16,16], index: 0, kind: input, shape index: {}]
  %s1 = inlined_call_operand.vmem [shape: f32[16,8], index: 1, kind: input, shape index: {}]
  %s2 = inlined_call_operand.vmem [shape: f32[3,8,16], index: 2, kind: input, shape index: {}]
  %s3 = inlined_call_operand.vmem [shape: f32[1,16], index: 3, kind: input, shape index: {}]
  %s4 = inlined_call_operand.hbm [shape: f32[16,16], index: 4, kind: output, shape index: {}]
  %s5 = sld [smem:[#allocation0]]
  $region30: #{tpu_custom_call.1} parent=0
    _
  %s7 = ssub.s32 1, %s5
  %s8 = scalar_select 0, %s7, %s5
  $region1: #{tpu_custom_call.1} parent=0
    #allocation2 [shape = 'u8[8192]{0}', space=vmem, size = 0x2000, scoped, tag = 'input window, operand 0, single buffered']
    #allocation3 [shape = 's32[1]{0}', space=sflag, size = 0x4, scoped, tag = 'scoped memory for tpu_custom_call.1']
    #allocation4 [shape = 's32[1]{0}', space=sflag, size = 0x4, scoped, tag = 'scoped memory for tpu_custom_call.1']
    #allocation5 [shape = 'u8[8192]{0}', space=vmem, size = 0x2000, scoped, tag = 'output window, operand 0, single buffered']
    %9 = vsyncpa [#allocation3], 0
    %10 = vsyncpa [#allocation4], 0
    // Predicated region
    $region2: #{tpu_custom_call.1} parent=1 // pred_check
      _
    $region3: #{tpu_custom_call.1} parent=1 // pred_check_branch
      %12 = sbr.rel (0) target = $region5
    $region4: #{tpu_custom_call.1} parent=1 // pred_region
      %s14 = ssub.s32 256, 256
      %15 = vsyncadd [#allocation3], %s14
      %s16 = sshll.u32 [#allocation2], 4
      %s17 = int_to_ptr.vmem [resolvable:$true] %s16
      %22 = dma.hbm_to_vmem [thread:$0]  %s0, 256, %s17, [#allocation3], 128, 128, 8
    $region5: #{tpu_custom_call.1} parent=1 // pred_fallthru
      _
    // Predicated region
    $region6: #{tpu_custom_call.1} parent=1 // pred_check
      _
    $region7: #{tpu_custom_call.1} parent=1 // pred_check_branch
      %24 = sbr.rel (0) target = $region9
    $region8: #{tpu_custom_call.1} parent=1 // pred_region
      _
    $region9: #{tpu_custom_call.1} parent=1 // pred_fallthru
      _
    // Predicated region
    $region10: #{tpu_custom_call.1} parent=1 // pred_check
      _
    $region11: #{tpu_custom_call.1} parent=1 // pred_check_branch
      %26 = sbr.rel (0) target = $region13
    $region12: #{tpu_custom_call.1} parent=1 // pred_region
      _
    $region13: #{tpu_custom_call.1} parent=1 // pred_fallthru
      _
    // Predicated region
    $region14: #{tpu_custom_call.1} parent=1 // pred_check
      _
    $region15: #{tpu_custom_call.1} parent=1 // pred_check_branch
      %28 = sbr.rel (0) target = $region17
    $region16: #{tpu_custom_call.1} parent=1 // pred_region
      _
    $region17: #{tpu_custom_call.1} parent=1 // pred_fallthru
      _
    // Predicated region
    $region18: #{tpu_custom_call.1} parent=1 // pred_check
      _
    $region19: #{tpu_custom_call.1} parent=1 // pred_check_branch
      %30 = sbr.rel (0) target = $region21
    $region20: #{tpu_custom_call.1} parent=1 // pred_region
      %31 = dma.done [#allocation3], 256
    $region21: #{tpu_custom_call.1} parent=1 // pred_fallthru
      _
    %v32 = vld [vmem:[#allocation2] sm:$0xff]
    %v33 = vld [vmem:[#allocation2 + $0x8] sm:$0xff]
    %v34 = vld [vmem:[%s1] sm:$0xff]
    %v35 = vld [vmem:[%s1 + $0x8] sm:$0xff]
    %v36 = vld [vmem:[%s2] sm:$0xff]
    %vm37 = vcmask 130048
    %v39 = vsel %vm37, %v32, 0
    %v42 = vsel %vm37, %v33, 0
    %44 = vmatprep.subr.mxu0 0.0
    %45 = vmatpush1.msra.mxu0 0.0
    %46 = vmatprep.subr.mxu0 0.0
    %47 = vmatpush1.msra.mxu0 0.0
    %48 = vmatprep.subr.mxu0 0.0
    %49 = vmatpush1.msra.mxu0 0.0
    %50 = vmatprep.subr.mxu0 0.0
    %51 = vmatpush1.msra.mxu0 0.0
    %52 = vmatprep.subr.mxu0 0.0
    %53 = vmatpush1.msra.mxu0 0.0
    %54 = vmatprep.subr.mxu0 0.0
    %55 = vmatpush1.msra.mxu0 0.0
    %56 = vmatprep.subr.mxu0 0.0
    %57 = vmatpush1.msra.mxu0 0.0
    %58 = vmatprep.subr.mxu0 0.0
    %59 = vmatpush1.msra.mxu0 0.0
    %60 = vmatprep.subr.mxu0 0.0
    %61 = vmatpush1.msra.mxu0 0.0
    %62 = vmatprep.subr.mxu0 0.0
    %63 = vmatpush1.msra.mxu0 0.0
    %64 = vmatprep.subr.mxu0 0.0
    %65 = vmatpush1.msra.mxu0 0.0
    %66 = vmatprep.subr.mxu0 0.0
    %67 = vmatpush1.msra.mxu0 0.0
    %68 = vmatprep.subr.mxu0 0.0
    %69 = vmatpush1.msra.mxu0 0.0
    %70 = vmatprep.subr.mxu0 0.0
    %71 = vmatpush1.msra.mxu0 0.0
    %72 = vmatprep.subr.mxu0 0.0
    %73 = vmatpush1.msra.mxu0 %v35
    %74 = vmatprep.subr.mxu0 0.0
    %75 = vmatpush1.msra.mxu0 %v34
    %76 = vmatprep.subr.mxu0 0.0
    %77 = vmatpush2.msra.mxu0 0.0
    %78 = vmatprep.subr.mxu0 0.0
    %79 = vmatpush2.msra.mxu0 0.0
    %80 = vmatprep.subr.mxu0 0.0
    %81 = vmatpush2.msra.mxu0 0.0
    %82 = vmatprep.subr.mxu0 0.0
    %83 = vmatpush2.msra.mxu0 0.0
    %84 = vmatprep.subr.mxu0 0.0
    %85 = vmatpush2.msra.mxu0 0.0
    %86 = vmatprep.subr.mxu0 0.0
    %87 = vmatpush2.msra.mxu0 0.0
    %88 = vmatprep.subr.mxu0 0.0
    %89 = vmatpush2.msra.mxu0 0.0
    %90 = vmatprep.subr.mxu0 0.0
    %91 = vmatpush2.msra.mxu0 0.0
    %92 = vmatprep.subr.mxu0 0.0
    %93 = vmatpush2.msra.mxu0 0.0
    %94 = vmatprep.subr.mxu0 0.0
    %95 = vmatpush2.msra.mxu0 0.0
    %96 = vmatprep.subr.mxu0 0.0
    %97 = vmatpush2.msra.mxu0 0.0
    %98 = vmatprep.subr.mxu0 0.0
    %99 = vmatpush2.msra.mxu0 0.0
    %100 = vmatprep.subr.mxu0 0.0
    %101 = vmatpush2.msra.mxu0 0.0
    %102 = vmatprep.subr.mxu0 0.0
    %103 = vmatpush2.msra.mxu0 0.0
    %104 = vmatprep.subr.mxu0 0.0
    %105 = vmatpush2.msra.mxu0 0.0
    %106 = vmatprep.subr.mxu0 0.0
    %107 = vmatpush2.msra.mxu0 0.0
    %108 = vmatprep.mubr.f32.mxu0 0.0
    %109 = vmatmul.mubr.f32.gmra.mxu0 %v39
    %v110 = vpop.f32.mrf.mxu0
    %v111 = vadd.f32 0.0, %v110
    %v112 = vpop.f32.mrf.mxu0
    %113 = vmatprep.mubr.f32.mxu0 0.0
    %114 = vmatmul.mubr.f32.gmra.mxu0 %v42
    %v115 = vpop.f32.mrf.mxu0
    %v116 = vadd.f32 0.0, %v115
    %v117 = vpop.f32.mrf.mxu0
    %118 = vdwg.mxu0
    %s119 = scalar_lea.vmem %s2, 8
    %v120 = vld [vmem:[%s119] sm:$0xff]
    %vm121 = vcmask 64512
    %v123 = vsel %vm121, %v111, 0
    %v126 = vsel %vm121, %v116, 0
    %128 = vmatprep.subr.mxu0 0.0
    %129 = vmatpush1.msra.mxu0 0.0
    %130 = vmatprep.subr.mxu0 0.0
    %131 = vmatpush1.msra.mxu0 0.0
    %132 = vmatprep.subr.mxu0 0.0
    %133 = vmatpush1.msra.mxu0 0.0
    %134 = vmatprep.subr.mxu0 0.0
    %135 = vmatpush1.msra.mxu0 0.0
    %136 = vmatprep.subr.mxu0 0.0
    %137 = vmatpush1.msra.mxu0 0.0
    %138 = vmatprep.subr.mxu0 0.0
    %139 = vmatpush1.msra.mxu0 0.0
    %140 = vmatprep.subr.mxu0 0.0
    %141 = vmatpush1.msra.mxu0 0.0
    %142 = vmatprep.subr.mxu0 0.0
    %143 = vmatpush1.msra.mxu0 0.0
    %144 = vmatprep.subr.mxu0 0.0
    %145 = vmatpush1.msra.mxu0 0.0
    %146 = vmatprep.subr.mxu0 0.0
    %147 = vmatpush1.msra.mxu0 0.0
    %148 = vmatprep.subr.mxu0 0.0
    %149 = vmatpush1.msra.mxu0 0.0
    %150 = vmatprep.subr.mxu0 0.0
    %151 = vmatpush1.msra.mxu0 0.0
    %152 = vmatprep.subr.mxu0 0.0
    %153 = vmatpush1.msra.mxu0 0.0
    %154 = vmatprep.subr.mxu0 0.0
    %155 = vmatpush1.msra.mxu0 0.0
    %156 = vmatprep.subr.mxu0 0.0
    %157 = vmatpush1.msra.mxu0 0.0
    %158 = vmatprep.subr.mxu0 0.0
    %159 = vmatpush1.msra.mxu0 %v120
    %160 = vmatprep.subr.mxu0 0.0
    %161 = vmatpush2.msra.mxu0 0.0
    %162 = vmatprep.subr.mxu0 0.0
    %163 = vmatpush2.msra.mxu0 0.0
    %164 = vmatprep.subr.mxu0 0.0
    %165 = vmatpush2.msra.mxu0 0.0
    %166 = vmatprep.subr.mxu0 0.0
    %167 = vmatpush2.msra.mxu0 0.0
    %168 = vmatprep.subr.mxu0 0.0
    %169 = vmatpush2.msra.mxu0 0.0
    %170 = vmatprep.subr.mxu0 0.0
    %171 = vmatpush2.msra.mxu0 0.0
    %172 = vmatprep.subr.mxu0 0.0
    %173 = vmatpush2.msra.mxu0 0.0
    %174 = vmatprep.subr.mxu0 0.0
    %175 = vmatpush2.msra.mxu0 0.0
    %176 = vmatprep.subr.mxu0 0.0
    %177 = vmatpush2.msra.mxu0 0.0
    %178 = vmatprep.subr.mxu0 0.0
    %179 = vmatpush2.msra.mxu0 0.0
    %180 = vmatprep.subr.mxu0 0.0
    %181 = vmatpush2.msra.mxu0 0.0
    %182 = vmatprep.subr.mxu0 0.0
    %183 = vmatpush2.msra.mxu0 0.0
    %184 = vmatprep.subr.mxu0 0.0
    %185 = vmatpush2.msra.mxu0 0.0
    %186 = vmatprep.subr.mxu0 0.0
    %187 = vmatpush2.msra.mxu0 0.0
    %188 = vmatprep.subr.mxu0 0.0
    %189 = vmatpush2.msra.mxu0 0.0
    %190 = vmatprep.subr.mxu0 0.0
    %191 = vmatpush2.msra.mxu0 0.0
    %192 = vmatprep.mubr.f32.mxu0 0.0
    %193 = vmatmul.mubr.f32.gmra.mxu0 %v123
    %v194 = vpop.f32.mrf.mxu0
    %v195 = vadd.f32 0.0, %v194
    %v196 = vpop.f32.mrf.mxu0
    %197 = vmatprep.mubr.f32.mxu0 0.0
    %198 = vmatmul.mubr.f32.gmra.mxu0 %v126
    %v199 = vpop.f32.mrf.mxu0
    %v200 = vadd.f32 0.0, %v199
    %v201 = vpop.f32.mrf.mxu0
    %202 = vdwg.mxu0
    %v204 = vsel %vm121, %v34, 0
    %v207 = vsel %vm121, %v35, 0
    %209 = vmatprep.subr.mxu0 0.0
    %210 = vmatpush1.msra.mxu0 0.0
    %211 = vmatprep.subr.mxu0 0.0
    %212 = vmatpush1.msra.mxu0 0.0
    %213 = vmatprep.subr.mxu0 0.0
    %214 = vmatpush1.msra.mxu0 0.0
    %215 = vmatprep.subr.mxu0 0.0
    %216 = vmatpush1.msra.mxu0 0.0
    %217 = vmatprep.subr.mxu0 0.0
    %218 = vmatpush1.msra.mxu0 0.0
    %219 = vmatprep.subr.mxu0 0.0
    %220 = vmatpush1.msra.mxu0 0.0
    %221 = vmatprep.subr.mxu0 0.0
    %222 = vmatpush1.msra.mxu0 0.0
    %223 = vmatprep.subr.mxu0 0.0
    %224 = vmatpush1.msra.mxu0 0.0
    %225 = vmatprep.subr.mxu0 0.0
    %226 = vmatpush1.msra.mxu0 0.0
    %227 = vmatprep.subr.mxu0 0.0
    %228 = vmatpush1.msra.mxu0 0.0
    %229 = vmatprep.subr.mxu0 0.0
    %230 = vmatpush1.msra.mxu0 0.0
    %231 = vmatprep.subr.mxu0 0.0
    %232 = vmatpush1.msra.mxu0 0.0
    %233 = vmatprep.subr.mxu0 0.0
    %234 = vmatpush1.msra.mxu0 0.0
    %235 = vmatprep.subr.mxu0 0.0
    %236 = vmatpush1.msra.mxu0 0.0
    %237 = vmatprep.subr.mxu0 0.0
    %238 = vmatpush1.msra.mxu0 0.0
    %239 = vmatprep.subr.mxu0 0.0
    %240 = vmatpush1.msra.mxu0 %v36
    %241 = vmatprep.subr.mxu0 0.0
    %242 = vmatpush2.msra.mxu0 0.0
    %243 = vmatprep.subr.mxu0 0.0
    %244 = vmatpush2.msra.mxu0 0.0
    %245 = vmatprep.subr.mxu0 0.0
    %246 = vmatpush2.msra.mxu0 0.0
    %247 = vmatprep.subr.mxu0 0.0
    %248 = vmatpush2.msra.mxu0 0.0
    %249 = vmatprep.subr.mxu0 0.0
    %250 = vmatpush2.msra.mxu0 0.0
    %251 = vmatprep.subr.mxu0 0.0
    %252 = vmatpush2.msra.mxu0 0.0
    %253 = vmatprep.subr.mxu0 0.0
    %254 = vmatpush2.msra.mxu0 0.0
    %255 = vmatprep.subr.mxu0 0.0
    %256 = vmatpush2.msra.mxu0 0.0
    %257 = vmatprep.subr.mxu0 0.0
    %258 = vmatpush2.msra.mxu0 0.0
    %259 = vmatprep.subr.mxu0 0.0
    %260 = vmatpush2.msra.mxu0 0.0
    %261 = vmatprep.subr.mxu0 0.0
    %262 = vmatpush2.msra.mxu0 0.0
    %263 = vmatprep.subr.mxu0 0.0
    %264 = vmatpush2.msra.mxu0 0.0
    %265 = vmatprep.subr.mxu0 0.0
    %266 = vmatpush2.msra.mxu0 0.0
    %267 = vmatprep.subr.mxu0 0.0
    %268 = vmatpush2.msra.mxu0 0.0
    %269 = vmatprep.subr.mxu0 0.0
    %270 = vmatpush2.msra.mxu0 0.0
    %271 = vmatprep.subr.mxu0 0.0
    %272 = vmatpush2.msra.mxu0 0.0
    %273 = vmatprep.mubr.f32.mxu0 0.0
    %274 = vmatmul.mubr.f32.gmra.mxu0 %v204
    %v275 = vpop.f32.mrf.mxu0
    %v276 = vadd.f32 %v195, %v275
    %v277 = vpop.f32.mrf.mxu0
    %278 = vmatprep.mubr.f32.mxu0 0.0
    %279 = vmatmul.mubr.f32.gmra.mxu0 %v207
    %v280 = vpop.f32.mrf.mxu0
    %v281 = vadd.f32 %v200, %v280
    %v282 = vpop.f32.mrf.mxu0
    %283 = vdwg.mxu0
    %284 = vmatprep.subr.mxu0 0.0
    %285 = vmatpush1.msra.mxu0 0.0
    %286 = vmatprep.subr.mxu0 0.0
    %287 = vmatpush1.msra.mxu0 0.0
    %288 = vmatprep.subr.mxu0 0.0
    %289 = vmatpush1.msra.mxu0 0.0
    %290 = vmatprep.subr.mxu0 0.0
    %291 = vmatpush1.msra.mxu0 0.0
    %292 = vmatprep.subr.mxu0 0.0
    %293 = vmatpush1.msra.mxu0 0.0
    %294 = vmatprep.subr.mxu0 0.0
    %295 = vmatpush1.msra.mxu0 0.0
    %296 = vmatprep.subr.mxu0 0.0
    %297 = vmatpush1.msra.mxu0 0.0
    %298 = vmatprep.subr.mxu0 0.0
    %299 = vmatpush1.msra.mxu0 0.0
    %300 = vmatprep.subr.mxu0 0.0
    %301 = vmatpush1.msra.mxu0 0.0
    %302 = vmatprep.subr.mxu0 0.0
    %303 = vmatpush1.msra.mxu0 0.0
    %304 = vmatprep.subr.mxu0 0.0
    %305 = vmatpush1.msra.mxu0 0.0
    %306 = vmatprep.subr.mxu0 0.0
    %307 = vmatpush1.msra.mxu0 0.0
    %308 = vmatprep.subr.mxu0 0.0
    %309 = vmatpush1.msra.mxu0 0.0
    %310 = vmatprep.subr.mxu0 0.0
    %311 = vmatpush1.msra.mxu0 0.0
    %312 = vmatprep.subr.mxu0 0.0
    %313 = vmatpush1.msra.mxu0 %v116
    %314 = vmatprep.subr.mxu0 0.0
    %315 = vmatpush1.msra.mxu0 %v111
    %316 = vmatprep.subr.mxu0 0.0
    %317 = vmatpush2.msra.mxu0 0.0
    %318 = vmatprep.subr.mxu0 0.0
    %319 = vmatpush2.msra.mxu0 0.0
    %320 = vmatprep.subr.mxu0 0.0
    %321 = vmatpush2.msra.mxu0 0.0
    %322 = vmatprep.subr.mxu0 0.0
    %323 = vmatpush2.msra.mxu0 0.0
    %324 = vmatprep.subr.mxu0 0.0
    %325 = vmatpush2.msra.mxu0 0.0
    %326 = vmatprep.subr.mxu0 0.0
    %327 = vmatpush2.msra.mxu0 0.0
    %328 = vmatprep.subr.mxu0 0.0
    %329 = vmatpush2.msra.mxu0 0.0
    %330 = vmatprep.subr.mxu0 0.0
    %331 = vmatpush2.msra.mxu0 0.0
    %332 = vmatprep.subr.mxu0 0.0
    %333 = vmatpush2.msra.mxu0 0.0
    %334 = vmatprep.subr.mxu0 0.0
    %335 = vmatpush2.msra.mxu0 0.0
    %336 = vmatprep.subr.mxu0 0.0
    %337 = vmatpush2.msra.mxu0 0.0
    %338 = vmatprep.subr.mxu0 0.0
    %339 = vmatpush2.msra.mxu0 0.0
    %340 = vmatprep.subr.mxu0 0.0
    %341 = vmatpush2.msra.mxu0 0.0
    %342 = vmatprep.subr.mxu0 0.0
    %343 = vmatpush2.msra.mxu0 0.0
    %344 = vmatprep.subr.mxu0 0.0
    %345 = vmatpush2.msra.mxu0 0.0
    %346 = vmatprep.subr.mxu0 0.0
    %347 = vmatpush2.msra.mxu0 0.0
    %348 = vmatprep.mubr.f32.mxu0 0.0
    %349 = vmatmul.mubr.f32.gmra.mxu0 %v39
    %v350 = vpop.f32.mrf.mxu0
    %v351 = vadd.f32 0.0, %v350
    %v352 = vpop.f32.mrf.mxu0
    %353 = vmatprep.mubr.f32.mxu0 0.0
    %354 = vmatmul.mubr.f32.gmra.mxu0 %v42
    %v355 = vpop.f32.mrf.mxu0
    %v356 = vadd.f32 0.0, %v355
    %v357 = vpop.f32.mrf.mxu0
    %358 = vdwg.mxu0
    %v359 = vmul.f32 %v351, 2.0
    %v360 = vmul.f32 %v356, 2.0
    %v361 = vsub.f32 %v359, %v34
    %v362 = vsub.f32 %v360, %v35
    %s363 = scalar_lea.vmem %s2, 16
    %v364 = vld [vmem:[%s363] sm:$0xff]
    %v366 = vsel %vm121, %v361, 0
    %v369 = vsel %vm121, %v362, 0
    %371 = vmatprep.subr.mxu0 0.0
    %372 = vmatpush1.msra.mxu0 0.0
    %373 = vmatprep.subr.mxu0 0.0
    %374 = vmatpush1.msra.mxu0 0.0
    %375 = vmatprep.subr.mxu0 0.0
    %376 = vmatpush1.msra.mxu0 0.0
    %377 = vmatprep.subr.mxu0 0.0
    %378 = vmatpush1.msra.mxu0 0.0
    %379 = vmatprep.subr.mxu0 0.0
    %380 = vmatpush1.msra.mxu0 0.0
    %381 = vmatprep.subr.mxu0 0.0
    %382 = vmatpush1.msra.mxu0 0.0
    %383 = vmatprep.subr.mxu0 0.0
    %384 = vmatpush1.msra.mxu0 0.0
    %385 = vmatprep.subr.mxu0 0.0
    %386 = vmatpush1.msra.mxu0 0.0
    %387 = vmatprep.subr.mxu0 0.0
    %388 = vmatpush1.msra.mxu0 0.0
    %389 = vmatprep.subr.mxu0 0.0
    %390 = vmatpush1.msra.mxu0 0.0
    %391 = vmatprep.subr.mxu0 0.0
    %392 = vmatpush1.msra.mxu0 0.0
    %393 = vmatprep.subr.mxu0 0.0
    %394 = vmatpush1.msra.mxu0 0.0
    %395 = vmatprep.subr.mxu0 0.0
    %396 = vmatpush1.msra.mxu0 0.0
    %397 = vmatprep.subr.mxu0 0.0
    %398 = vmatpush1.msra.mxu0 0.0
    %399 = vmatprep.subr.mxu0 0.0
    %400 = vmatpush1.msra.mxu0 0.0
    %401 = vmatprep.subr.mxu0 0.0
    %402 = vmatpush1.msra.mxu0 %v364
    %403 = vmatprep.subr.mxu0 0.0
    %404 = vmatpush2.msra.mxu0 0.0
    %405 = vmatprep.subr.mxu0 0.0
    %406 = vmatpush2.msra.mxu0 0.0
    %407 = vmatprep.subr.mxu0 0.0
    %408 = vmatpush2.msra.mxu0 0.0
    %409 = vmatprep.subr.mxu0 0.0
    %410 = vmatpush2.msra.mxu0 0.0
    %411 = vmatprep.subr.mxu0 0.0
    %412 = vmatpush2.msra.mxu0 0.0
    %413 = vmatprep.subr.mxu0 0.0
    %414 = vmatpush2.msra.mxu0 0.0
    %415 = vmatprep.subr.mxu0 0.0
    %416 = vmatpush2.msra.mxu0 0.0
    %417 = vmatprep.subr.mxu0 0.0
    %418 = vmatpush2.msra.mxu0 0.0
    %419 = vmatprep.subr.mxu0 0.0
    %420 = vmatpush2.msra.mxu0 0.0
    %421 = vmatprep.subr.mxu0 0.0
    %422 = vmatpush2.msra.mxu0 0.0
    %423 = vmatprep.subr.mxu0 0.0
    %424 = vmatpush2.msra.mxu0 0.0
    %425 = vmatprep.subr.mxu0 0.0
    %426 = vmatpush2.msra.mxu0 0.0
    %427 = vmatprep.subr.mxu0 0.0
    %428 = vmatpush2.msra.mxu0 0.0
    %429 = vmatprep.subr.mxu0 0.0
    %430 = vmatpush2.msra.mxu0 0.0
    %431 = vmatprep.subr.mxu0 0.0
    %432 = vmatpush2.msra.mxu0 0.0
    %433 = vmatprep.subr.mxu0 0.0
    %434 = vmatpush2.msra.mxu0 0.0
    %435 = vmatprep.mubr.f32.mxu0 0.0
    %436 = vmatmul.mubr.f32.gmra.mxu0 %v366
    %v437 = vpop.f32.mrf.mxu0
    %v438 = vadd.f32 0.0, %v437
    %v439 = vpop.f32.mrf.mxu0
    %440 = vmatprep.mubr.f32.mxu0 0.0
    %441 = vmatmul.mubr.f32.gmra.mxu0 %v369
    %v442 = vpop.f32.mrf.mxu0
    %v443 = vadd.f32 0.0, %v442
    %v444 = vpop.f32.mrf.mxu0
    %445 = vdwg.mxu0
    %v446 = vadd.f32 %v276, %v438
    %v447 = vadd.f32 %v281, %v443
    %v448 = vld [vmem:[%s3] sm:$0x1]
    %v450 = vlaneseq
    %v451 = vshrl.u32 %v450, 7
    %v452 = vsub.s32 0, %v451
    %v453 = vrot.slane %v448, %v452
    %v455 = vadd.f32 %v446, %v453
    %v456 = vadd.f32 %v447, %v453
    %457 = vst.msk [vmem:[#allocation5] sm:$0xff] %vm37, %v455
    %458 = vst.msk [vmem:[#allocation5 + $0x8] sm:$0xff] %vm37, %v456
    // Predicated region
    $region22: #{tpu_custom_call.1} parent=1 // pred_check
      _
    $region23: #{tpu_custom_call.1} parent=1 // pred_check_branch
      %460 = sbr.rel (0) target = $region25
    $region24: #{tpu_custom_call.1} parent=1 // pred_region
      %s462 = ssub.s32 256, 256
      %463 = vsyncadd [#allocation4], %s462
      %s464 = sshll.u32 [#allocation5], 4
      %s465 = int_to_ptr.vmem [resolvable:$true] %s464
      %470 = dma.vmem_to_hbm [thread:$0]  %s465, 256, %s4, [#allocation4], 128, 128, 8
    $region25: #{tpu_custom_call.1} parent=1 // pred_fallthru
      _
    // Predicated region
    $region26: #{tpu_custom_call.1} parent=1 // pred_check
      _
    $region27: #{tpu_custom_call.1} parent=1 // pred_check_branch
      %472 = sbr.rel (0) target = $region29
    $region28: #{tpu_custom_call.1} parent=1 // pred_region
      %473 = dma.done [#allocation4], 256
    $region29: #{tpu_custom_call.1} parent=1 // pred_fallthru
      _
    %474 = vsyncpa [#allocation3], 1
    %475 = vsyncpa [#allocation4], 1

</llo_original>
